<compile_context>
chip_gen: v7x
topology: tpu7x:2x2x1
jax: 0.10.0
libtpu: 0.0.40
codegen_flags: <defaults>
</compile_context>

<pallas_src>
import functools

import jax
import jax.numpy as jnp
from jax.experimental import pallas as pl
from jax.experimental.pallas import tpu as pltpu
from jax.scipy.special import logsumexp as _logsumexp


def _round_up(x: int, m: int) -> int:
    return ((x + m - 1) // m) * m


def _choose_row_tile(n: int, max_tq: int, logits_budget_bytes: int):
    """Pick (TQ, Np): minimal row padding, with the (TQ, Np) f32 logits block capped."""
    cap = max(8, min(max_tq, _round_up(n, 8)))
    while True:
        nt = -(-n // cap)                  # number of row tiles
        tq = _round_up(-(-n // nt), 8)     # smallest 8-aligned tile covering n in nt tiles
        np_ = nt * tq
        if tq <= 8 or tq * np_ * 4 <= logits_budget_bytes:
            return tq, np_
        cap = max(8, cap // 2)


def _contrastive_kernel(q_ref, k_ref, loss_ref, col_scale_ref, col_bias_ref, acc_ref,
                        *, inv_temp, tq, n_valid, n_pad):
    r = pl.program_id(1)
    f32 = jnp.float32
    eps = f32(1e-12)

    @pl.when(r == 0)
    def _init():
        # Per-batch init: zero the accumulator and build the per-column (= per K patch)
        # reciprocal L1 norm directly in (1, Np) lane layout via ones @ |K|^T (MXU),
        # plus the additive padding bias.  Raw K stays in its input dtype.
        acc_ref[...] = jnp.zeros_like(acc_ref)
        absk = jnp.abs(k_ref[0])                                         # (Np, C)
        ones = jnp.ones((8, absk.shape[-1]), absk.dtype)
        norms = jax.lax.dot_general(
            ones, absk,
            dimension_numbers=(((1,), (1,)), ((), ())),
            preferred_element_type=f32)                                  # (8, Np)
        col_scale_ref[...] = pl.reciprocal(
            jnp.maximum(norms[0:1, :], eps), approx=False)               # (1, Np)
        if n_pad != n_valid:  # static: only emitted when the patch axis was padded
            col = jax.lax.broadcasted_iota(jnp.int32, (1, n_pad), 1)
            col_bias_ref[...] = jnp.where(col < n_valid, f32(0.0), f32(-1e30))

    # F.normalize(..., p=1, dim=-1) on this Q row tile (f32), with 1/T folded in.
    q = q_ref[0].astype(f32)                                             # (TQ, C)
    q_inv = pl.reciprocal(
        jnp.maximum(jnp.sum(jnp.abs(q), axis=-1, keepdims=True), eps), approx=False)
    q = q * (q_inv * f32(inv_temp))
    q_mm = q.astype(k_ref.dtype)                                         # MXU operand dtype = input dtype

    # Positive logit = diagonal of S: row-wise dot with the matching raw K rows, scaled
    # by their (recomputed, tiny) reciprocal norms.  Sublane-dynamic slice only.
    row0 = pl.multiple_of(r * tq, tq)
    k_rows = k_ref[0, pl.ds(row0, tq), :].astype(f32)                    # (TQ, C)
    k_rows_inv = pl.reciprocal(
        jnp.maximum(jnp.sum(jnp.abs(k_rows), axis=-1, keepdims=True), eps), approx=False)
    diag = jnp.sum(q * k_rows, axis=-1, keepdims=True) * k_rows_inv      # (TQ, 1)

    # Similarity logits against the raw K block: NT-form contraction on the lane (C)
    # axis of both operands; K's L1 normalization applied as a per-column scale.
    s = jax.lax.dot_general(
        q_mm, k_ref[0],
        dimension_numbers=(((1,), (1,)), ((), ())),
        preferred_element_type=f32)                                      # (TQ, Np) f32
    s = s * col_scale_ref[...]
    if n_pad != n_valid:  # static: single broadcast add, bias built once per batch
        s = s + col_bias_ref[...]

    # Row-wise logsumexp over the full row of S == CE denominator over [l_pos, l_neg].
    m = jnp.max(s, axis=-1, keepdims=True)
    lse = m + jnp.log(jnp.sum(jnp.exp(s - m), axis=-1, keepdims=True))   # (TQ, 1)
    contrib = lse - diag

    if n_pad != n_valid:  # static: exclude padded (zero) query rows from the sum
        row = jax.lax.broadcasted_iota(jnp.int32, (tq, 1), 0) + row0
        contrib = jnp.where(row < n_valid, contrib, f32(0.0))

    acc_ref[...] += jnp.sum(contrib)

    @pl.when(r == pl.num_programs(1) - 1)
    def _fin():
        loss_ref[0] = acc_ref[...]


def contrastive_loss_sup(feat_q, feat_k, temperature=0.07, base_temperature=0.07,
                         max_row_tile=256):
    # base_temperature is unused in the PyTorch forward; kept for signature parity.
    assert feat_q.shape == feat_k.shape, (feat_q.shape, feat_k.shape)
    B, C = feat_q.shape[0], feat_q.shape[1]

    supported = (jnp.dtype(jnp.float32), jnp.dtype(jnp.bfloat16), jnp.dtype(jnp.float16))
    if jnp.dtype(feat_q.dtype) not in supported:
        feat_q = feat_q.astype(jnp.float32)
        feat_k = feat_k.astype(jnp.float32)
    if feat_k.dtype != feat_q.dtype:
        feat_k = feat_k.astype(feat_q.dtype)

    # (B, C, H, W) -> (B, C, N) -> (B, N, C); keep the input dtype (no HBM up-cast).
    q = feat_q.reshape(B, C, -1).transpose(0, 2, 1)
    k = feat_k.reshape(B, C, -1).transpose(0, 2, 1)
    N = q.shape[1]

    # VMEM capacity (64 MiB v7x-safe fallback) drives both the logits budget and the
    # derived vmem limit.
    try:
        vmem_cap = int(pltpu.get_tpu_info().vmem_capacity_bytes)
    except Exception:
        vmem_cap = 64 * 1024 * 1024

    logits_budget = max(2 * 1024 * 1024, vmem_cap // 12)
    TQ, Np = _choose_row_tile(N, max_row_tile, logits_budget)

    # Pad only the patch axis (to a multiple of TQ).  C is left unpadded: the block's
    # last dim equals the full array dim, so no lane padding / wasted traffic.
    if Np != N:
        q = jnp.pad(q, ((0, 0), (0, Np - N), (0, 0)))
        k = jnp.pad(k, ((0, 0), (0, Np - N), (0, 0)))

    # Derive the VMEM limit from the actual buffer sizes (review: no fixed 48 MiB).
    isize = q.dtype.itemsize
    c128 = _round_up(C, 128)
    np128 = _round_up(Np, 128)
    resident = (2 * TQ * c128 * isize        # Q double-buffer (lane-padded in VMEM)
                + 2 * Np * c128 * isize      # K double-buffer (input dtype)
                + 2 * 8 * np128 * 4          # col scale / bias scratches
                + 4 * 8 * 128 * 4)           # acc scratch + output block slack
    temporaries = 6 * TQ * np128 * 4         # logits + softmax temporaries headroom (f32)
    need = resident + temporaries + (2 << 20)
    vmem_limit = int(min(max(need, 32 * 1024 * 1024), int(vmem_cap * 0.9)))

    kernel = functools.partial(
        _contrastive_kernel,
        inv_temp=1.0 / temperature, tq=TQ, n_valid=N, n_pad=Np)

    per_batch = pl.pallas_call(
        kernel,
        out_shape=jax.ShapeDtypeStruct((B, 1, 1), jnp.float32),
        grid_spec=pltpu.PrefetchScalarGridSpec(
            num_scalar_prefetch=0,
            grid=(B, Np // TQ),
            in_specs=[
                pl.BlockSpec((1, TQ, C), lambda b, r: (b, r, 0)),   # Q row tiles
                pl.BlockSpec((1, Np, C), lambda b, r: (b, 0, 0)),   # raw K, resident per batch
            ],
            out_specs=pl.BlockSpec((1, 1, 1), lambda b, r: (b, 0, 0)),
            scratch_shapes=[
                pltpu.VMEM((1, Np), jnp.float32),   # reciprocal per-column L1 norms of K
                pltpu.VMEM((1, Np), jnp.float32),   # additive padding bias (0 / -1e30)
                pltpu.VMEM((1, 1), jnp.float32),    # per-batch loss accumulator
            ],
        ),
        compiler_params=pltpu.CompilerParams(
            # Batch axis parallel (megacore on v7x); row-tile axis accumulates -> arbitrary.
            dimension_semantics=("parallel", "arbitrary"),
            vmem_limit_bytes=vmem_limit,
        ),
    )(q, k)

    return jnp.sum(per_batch) / jnp.float32(B * N)


def _reference_loss(feat_q, feat_k, temperature=0.07):
    """Pure-JAX reference mirroring the PyTorch forward (for a sanity check)."""
    B, C = feat_q.shape[0], feat_q.shape[1]
    q = feat_q.reshape(B, C, -1).transpose(0, 2, 1).astype(jnp.float32)
    k = feat_k.reshape(B, C, -1).transpose(0, 2, 1).astype(jnp.float32)
    q = q / jnp.maximum(jnp.sum(jnp.abs(q), axis=-1, keepdims=True), 1e-12)
    k = k / jnp.maximum(jnp.sum(jnp.abs(k), axis=-1, keepdims=True), 1e-12)
    N = q.shape[1]
    l_pos = jnp.einsum("bnc,bnc->bn", q, k).reshape(-1, 1)
    l_neg = jnp.einsum("bnc,bmc->bnm", q, k)
    eye = jnp.eye(N, dtype=bool)[None]
    l_neg = jnp.where(eye, -jnp.inf, l_neg).reshape(-1, N)
    out = jnp.concatenate([l_pos, l_neg], axis=1) / temperature
    lse = _logsumexp(out, axis=1)
    return jnp.mean(lse - out[:, 0])


if __name__ == "__main__":
    key = jax.random.PRNGKey(0)
    kq, kk = jax.random.split(key)

    # (a) no-padding case: N = 16 patches, C = 8 features (left unpadded on lanes).
    B, C, H, W = 2, 8, 4, 4
    fq = jax.random.normal(kq, (B, C, H, W), dtype=jnp.float32)
    fk = jax.random.normal(kk, (B, C, H, W), dtype=jnp.float32)
    loss = jax.block_until_ready(contrastive_loss_sup(fq, fk, temperature=0.07))
    ref = _reference_loss(fq, fk, temperature=0.07)
    assert jnp.allclose(loss, ref, rtol=1e-4, atol=1e-5), (loss, ref)

    # (b) padded patch axis: N = 20 -> Np = 24, single row tile.
    B, C, H, W = 2, 8, 4, 5
    fq = jax.random.normal(kq, (B, C, H, W), dtype=jnp.float32)
    fk = jax.random.normal(kk, (B, C, H, W), dtype=jnp.float32)
    ref = _reference_loss(fq, fk, temperature=0.07)
    loss = jax.block_until_ready(contrastive_loss_sup(fq, fk, temperature=0.07))
    assert jnp.allclose(loss, ref, rtol=1e-4, atol=1e-5), (loss, ref)

    # (c) multiple row tiles + padding: exercises init / accumulate / finalize path.
    loss_mt = jax.block_until_ready(
        contrastive_loss_sup(fq, fk, temperature=0.07, max_row_tile=8))
    assert jnp.allclose(loss_mt, ref, rtol=1e-4, atol=1e-5), (loss_mt, ref)

    # (d) bf16 inputs: raw bf16 K / bf16 Q operands on the MXU, f32 softmax math.
    loss_bf16 = jax.block_until_ready(
        contrastive_loss_sup(fq.astype(jnp.bfloat16), fk.astype(jnp.bfloat16),
                             temperature=0.07))
    ref_bf16 = _reference_loss(fq.astype(jnp.bfloat16), fk.astype(jnp.bfloat16),
                               temperature=0.07)
    assert jnp.allclose(loss_bf16, ref_bf16, rtol=3e-2, atol=3e-2), (loss_bf16, ref_bf16)

    print("KERNEL_OK")
</pallas_src>

<mosaic_0001>
module attributes {stable_mosaic.version = 11 : i64} {
  func.func @_contrastive_kernel(%arg0: i32, %arg1: i32, %arg2: memref<1x16x8xf32, #tpu.memory_space<vmem>>, %arg3: memref<1x16x8xf32, #tpu.memory_space<vmem>>, %arg4: memref<1x1x1xf32, #tpu.memory_space<vmem>>, %arg5: memref<1x16xf32, #tpu.memory_space<vmem>>, %arg6: memref<1x16xf32, #tpu.memory_space<vmem>>, %arg7: memref<1x1xf32, #tpu.memory_space<vmem>>) attributes {dimension_semantics = [#tpu.dimension_semantics<parallel>, #tpu.dimension_semantics<arbitrary>], iteration_bounds = array<i64: 2, 1>, scalar_prefetch = 0 : i64, scratch_operands = 3 : i64, tpu.core_type = #tpu.core_type<tc>, window_params = [{transform_indices = @transform_0, window_bounds = array<i64: 1, 16, 8>}, {transform_indices = @transform_1, window_bounds = array<i64: 1, 16, 8>}, {transform_indices = @transform_2, window_bounds = array<i64: 1, 1, 1>}]} {
    %c0_i32 = arith.constant 0 : i32
    %0 = arith.cmpi eq, %arg1, %c0_i32 : i32
    %1 = arith.extui %0 : i1 to i32
    %cst = arith.constant 9.99999996E-13 : f32
    %c0_i32_0 = arith.constant 0 : i32
    %2 = arith.cmpi ne, %1, %c0_i32_0 : i32
    scf.if %2 {
      %cst_26 = arith.constant 0.000000e+00 : f32
      %57 = vector.broadcast %cst_26 : f32 to vector<1x1xf32>
      %c0_27 = arith.constant 0 : index
      %c0_28 = arith.constant 0 : index
      %58 = vector.load %arg7[%c0_27, %c0_28] : memref<1x1xf32, #tpu.memory_space<vmem>>, vector<1x1xf32>
      tpu.vector_store %arg7[%c0_27, %c0_28], %57 {strides = array<i32>} : memref<1x1xf32, #tpu.memory_space<vmem>>, vector<1x1xf32>,
      %c0_29 = arith.constant 0 : index
      %c0_30 = arith.constant 0 : index
      %c0_31 = arith.constant 0 : index
      %59 = vector.load %arg3[%c0_29, %c0_30, %c0_31] : memref<1x16x8xf32, #tpu.memory_space<vmem>>, vector<1x16x8xf32>
      %60 = vector.shape_cast %59 : vector<1x16x8xf32> to vector<16x8xf32>
      %61 = math.absf %60 : vector<16x8xf32>
      %cst_32 = arith.constant 1.000000e+00 : f32
      %62 = vector.broadcast %cst_32 : f32 to vector<8x8xf32>
      %cst_33 = arith.constant dense<0.000000e+00> : vector<8x16xf32>
      %63 = tpu.matmul %62, %61, %cst_33 {dimension_numbers = #tpu.dot_dimension_numbers<[1], [1], [0], [0], [0, 0, 1, 0], [], []>} : vector<8x8xf32>, vector<16x8xf32>, vector<8x16xf32> -> vector<8x16xf32>
      %64 = vector.extract_strided_slice %63 {offsets = [0, 0], sizes = [1, 16], strides = [1, 1]} : vector<8x16xf32> to vector<1x16xf32>
      %65 = vector.broadcast %cst : f32 to vector<1x16xf32>
      %66 = arith.maximumf %64, %65 : vector<1x16xf32>
      %67 = tpu.reciprocal %66 : vector<1x16xf32> -> vector<1x16xf32>
      %c0_34 = arith.constant 0 : index
      %c0_35 = arith.constant 0 : index
      %68 = vector.load %arg5[%c0_34, %c0_35] : memref<1x16xf32, #tpu.memory_space<vmem>>, vector<1x16xf32>
      tpu.vector_store %arg5[%c0_34, %c0_35], %67 {strides = array<i32>} : memref<1x16xf32, #tpu.memory_space<vmem>>, vector<1x16xf32>,
    } else {
    }
    %c0 = arith.constant 0 : index
    %c0_1 = arith.constant 0 : index
    %c0_2 = arith.constant 0 : index
    %3 = vector.load %arg2[%c0, %c0_1, %c0_2] : memref<1x16x8xf32, #tpu.memory_space<vmem>>, vector<1x16x8xf32>
    %4 = vector.shape_cast %3 : vector<1x16x8xf32> to vector<16x8xf32>
    %5 = math.absf %4 : vector<16x8xf32>
    %cst_3 = arith.constant dense<0.000000e+00> : vector<16xf32>
    %6 = vector.multi_reduction <add>, %5, %cst_3 [1] : vector<16x8xf32> to vector<16xf32>
    %7 = vector.shape_cast %6 : vector<16xf32> to vector<16x1xf32>
    %cst_4 = arith.constant 9.99999996E-13 : f32
    %8 = vector.broadcast %cst_4 : f32 to vector<16x1xf32>
    %9 = arith.maximumf %7, %8 : vector<16x1xf32>
    %10 = tpu.reciprocal %9 : vector<16x1xf32> -> vector<16x1xf32>
    %cst_5 = arith.constant 14.2857141 : f32
    %11 = vector.broadcast %cst_5 : f32 to vector<16x1xf32>
    %12 = arith.mulf %10, %11 : vector<16x1xf32>
    %13 = vector.broadcast %12 : vector<16x1xf32> to vector<16x8xf32>
    %14 = arith.mulf %4, %13 : vector<16x8xf32>
    %c16_i32 = arith.constant 16 : i32
    %15 = arith.muli %arg1, %c16_i32 : i32
    %16 = tpu.assume_multiple %15, 16 : i32
    %c0_6 = arith.constant 0 : index
    %17 = arith.index_cast %16 : i32 to index
    %c0_7 = arith.constant 0 : index
    %18 = vector.load %arg3[%c0_6, %17, %c0_7] : memref<1x16x8xf32, #tpu.memory_space<vmem>>, vector<1x16x8xf32>
    %19 = vector.shape_cast %18 : vector<1x16x8xf32> to vector<16x8xf32>
    %20 = math.absf %19 : vector<16x8xf32>
    %cst_8 = arith.constant dense<0.000000e+00> : vector<16xf32>
    %21 = vector.multi_reduction <add>, %20, %cst_8 [1] : vector<16x8xf32> to vector<16xf32>
    %22 = vector.shape_cast %21 : vector<16xf32> to vector<16x1xf32>
    %cst_9 = arith.constant 9.99999996E-13 : f32
    %23 = vector.broadcast %cst_9 : f32 to vector<16x1xf32>
    %24 = arith.maximumf %22, %23 : vector<16x1xf32>
    %25 = tpu.reciprocal %24 : vector<16x1xf32> -> vector<16x1xf32>
    %26 = arith.mulf %14, %19 : vector<16x8xf32>
    %cst_10 = arith.constant dense<0.000000e+00> : vector<16xf32>
    %27 = vector.multi_reduction <add>, %26, %cst_10 [1] : vector<16x8xf32> to vector<16xf32>
    %28 = vector.shape_cast %27 : vector<16xf32> to vector<16x1xf32>
    %29 = arith.mulf %28, %25 : vector<16x1xf32>
    %c0_11 = arith.constant 0 : index
    %c0_12 = arith.constant 0 : index
    %c0_13 = arith.constant 0 : index
    %30 = vector.load %arg3[%c0_11, %c0_12, %c0_13] : memref<1x16x8xf32, #tpu.memory_space<vmem>>, vector<1x16x8xf32>
    %31 = vector.shape_cast %30 : vector<1x16x8xf32> to vector<16x8xf32>
    %cst_14 = arith.constant dense<0.000000e+00> : vector<16x16xf32>
    %32 = tpu.matmul %14, %31, %cst_14 {dimension_numbers = #tpu.dot_dimension_numbers<[1], [1], [0], [0], [0, 0, 1, 0], [], []>} : vector<16x8xf32>, vector<16x8xf32>, vector<16x16xf32> -> vector<16x16xf32>
    %c0_15 = arith.constant 0 : index
    %c0_16 = arith.constant 0 : index
    %33 = vector.load %arg5[%c0_15, %c0_16] : memref<1x16xf32, #tpu.memory_space<vmem>>, vector<1x16xf32>
    %34 = vector.broadcast %33 : vector<1x16xf32> to vector<16x16xf32>
    %35 = arith.mulf %32, %34 : vector<16x16xf32>
    %cst_17 = arith.constant dense<0xFF800000> : vector<16xf32>
    %36 = vector.multi_reduction <maximumf>, %35, %cst_17 [1] : vector<16x16xf32> to vector<16xf32>
    %37 = vector.shape_cast %36 : vector<16xf32> to vector<16x1xf32>
    %38 = vector.broadcast %37 : vector<16x1xf32> to vector<16x16xf32>
    %39 = arith.subf %35, %38 : vector<16x16xf32>
    %40 = math.exp %39 : vector<16x16xf32>
    %cst_18 = arith.constant dense<0.000000e+00> : vector<16xf32>
    %41 = vector.multi_reduction <add>, %40, %cst_18 [1] : vector<16x16xf32> to vector<16xf32>
    %42 = vector.shape_cast %41 : vector<16xf32> to vector<16x1xf32>
    %43 = math.log %42 : vector<16x1xf32>
    %44 = arith.addf %37, %43 : vector<16x1xf32>
    %45 = arith.subf %44, %29 : vector<16x1xf32>
    %c0_19 = arith.constant 0 : index
    %c0_20 = arith.constant 0 : index
    %46 = vector.load %arg7[%c0_19, %c0_20] : memref<1x1xf32, #tpu.memory_space<vmem>>, vector<1x1xf32>
    %47 = vector.shape_cast %45 : vector<16x1xf32> to vector<1x16x1xf32>
    %cst_21 = arith.constant dense<0.000000e+00> : vector<1xf32>
    %48 = vector.multi_reduction <add>, %47, %cst_21 [1, 2] : vector<1x16x1xf32> to vector<1xf32>
    %49 = vector.shape_cast %48 : vector<1xf32> to vector<1x1x1xf32>
    %50 = vector.extract %49[0, 0, 0] : f32 from vector<1x1x1xf32>
    %51 = vector.broadcast %50 : f32 to vector<1x1xf32>
    %52 = arith.addf %46, %51 : vector<1x1xf32>
    %c0_22 = arith.constant 0 : index
    %c0_23 = arith.constant 0 : index
    %53 = vector.load %arg7[%c0_22, %c0_23] : memref<1x1xf32, #tpu.memory_space<vmem>>, vector<1x1xf32>
    tpu.vector_store %arg7[%c0_22, %c0_23], %52 {strides = array<i32>} : memref<1x1xf32, #tpu.memory_space<vmem>>, vector<1x1xf32>,
    %c0_i32_24 = arith.constant 0 : i32
    %54 = arith.cmpi eq, %arg1, %c0_i32_24 : i32
    %55 = arith.extui %54 : i1 to i32
    %c0_i32_25 = arith.constant 0 : i32
    %56 = arith.cmpi ne, %55, %c0_i32_25 : i32
    scf.if %56 {
      %c0_26 = arith.constant 0 : index
      %c0_27 = arith.constant 0 : index
      %57 = vector.load %arg7[%c0_26, %c0_27] : memref<1x1xf32, #tpu.memory_space<vmem>>, vector<1x1xf32>
      %c0_28 = arith.constant 0 : index
      %c0_29 = arith.constant 0 : index
      %c0_30 = arith.constant 0 : index
      %58 = vector.load %arg4[%c0_28, %c0_29, %c0_30] : memref<1x1x1xf32, #tpu.memory_space<vmem>>, vector<1x1x1xf32>
      %59 = vector.shape_cast %58 : vector<1x1x1xf32> to vector<1x1xf32>
      %60 = vector.shape_cast %57 : vector<1x1xf32> to vector<1x1x1xf32>
      tpu.vector_store %arg4[%c0_28, %c0_29, %c0_30], %60 {strides = array<i32>} : memref<1x1x1xf32, #tpu.memory_space<vmem>>, vector<1x1x1xf32>,
    } else {
    }
    return
  }
  func.func @transform_0(%arg0: i32, %arg1: i32) -> (i32, i32, i32) {
    %c0_i32 = arith.constant 0 : i32
    %c0_i32_0 = arith.constant 0 : i32
    return %arg0, %arg1, %c0_i32 : i32, i32, i32
  }
  func.func @transform_1(%arg0: i32, %arg1: i32) -> (i32, i32, i32) {
    %c0_i32 = arith.constant 0 : i32
    %c0_i32_0 = arith.constant 0 : i32
    %c0_i32_1 = arith.constant 0 : i32
    return %arg0, %c0_i32, %c0_i32_0 : i32, i32, i32
  }
  func.func @transform_2(%arg0: i32, %arg1: i32) -> (i32, i32, i32) {
    %c0_i32 = arith.constant 0 : i32
    %c0_i32_0 = arith.constant 0 : i32
    %c0_i32_1 = arith.constant 0 : i32
    return %arg0, %c0_i32, %c0_i32_0 : i32, i32, i32
  }
}

</mosaic_0001>

<llo_original>
// kernel: tpu_custom_call.1
$region0: #{tpu_custom_call.1}
  #allocation0 [shape = 'u32[]', space=smem, size = 0x4, offset = 0x4, fixed_abs, tag = 'smem constant byte address 0x4 - core index']
  #allocation1 [shape = 'u32[144,128]{1,0:T(1,128)}', space=vmem, size = 0x12000, scoped, tag = 'internal scratch']
  #allocation2 [shape = 'f32[1,16]{1,0:T(1,128)}', space=vmem, size = 0x200, scoped, tag = 'scratch operand']
  #allocation3 [shape = 'f32[1,16]{1,0:T(1,128)}', space=vmem, size = 0x200, scoped, tag = 'scratch operand']
  #allocation4 [shape = 'f32[1,1]{1,0:T(1,128)}', space=vmem, size = 0x200, scoped, tag = 'scratch operand']
  %s0 = inlined_call_operand.vmem [shape: f32[2,16,8], index: 0, kind: input, shape index: {}]
  %s1 = inlined_call_operand.vmem [shape: f32[2,16,8], index: 1, kind: input, shape index: {}]
  %s2 = inlined_call_operand.vmem [shape: f32[2,1,1], index: 2, kind: output, shape index: {}]
  %s3 = sld [smem:[#allocation0]]
  $region49: #{tpu_custom_call.1} parent=0
    _
  %s5 = ssub.s32 1, %s3
  %s6 = scalar_select 0, %s5, %s3
  loop: start=0, step=1, limit=4
  $region2: #{tpu_custom_call.1} parent=0 // loop_pre_header
    _
  $region3: #{tpu_custom_call.1} parent=0 // loop_header
    %s8 = sphi 0, %s12
    %p9 = scmp.ge.s32.totalorder %s8, 4
    %s15 = sphi 0, %s27
    %s16 = sphi 0, %s23
    %s17 = sphi 0, %s15
    %s18 = sphi 0, %s16
    %s19 = sphi 0, %s17
    %s20 = sphi 0, %s18
    %s32 = sphi 0, %s34
    %s35 = sphi 0, %s32
    %s36 = sphi 0, %s35
    %s52 = sphi 0, %s36
    %s58 = sphi 0, %s60
    %s61 = sphi 0, %s58
    %s62 = sphi 0, %s61
    %s78 = sphi 0, %s62
    %s84 = sphi 0, %s86
    %s87 = sphi 0, %s84
    %s88 = sphi 0, %s87
    %s104 = sphi 0, %s88
  $region4: #{tpu_custom_call.1} parent=0 // loop_header_branch
    %11 = sbr.rel (%p9) target = $region8
  $region5: #{tpu_custom_call.1} parent=0 // loop_body
    %s13 = ssub.s32 %s8, 1
    %s14 = ssub.s32 %s8, 2
    %s21 = sadd.s32 1, %s16
    %p22 = scmp.ge.s32.totalorder %s21, 1
    %s23 = scalar_select %p22, 0, %s21
    %s24 = sadd.s32 1, %s15
    %s25 = scalar_select %p22, %s24, %s15
    %p26 = scmp.ge.s32.totalorder %s25, 2
    %s27 = scalar_select %p26, 0, %s25
    %s28 = ssub.s32 %s15, %s27
    %s29 = ssub.s32 %s16, %s23
    %s30 = sor.u32 %s28, %s29
    %p31 = scmp.eq.s32.totalorder %s30, 0
    %s33 = sadd.s32 %s32, 1
    %s34 = scalar_select %p31, %s32, %s33
    %p37 = pneg %p31
    %p38 = scmp.eq.s32.totalorder %s8, 1
    %p39 = por %p37, %p38
    %p40 = scmp.ne.s32.totalorder %s32, %s35
    %p41 = scmp.eq.s32.totalorder %s8, 0
    %p42 = por %p40, %p41
    %p43 = scmp.ne.s32.totalorder %s32, %s35
    %p44 = scmp.eq.s32.totalorder %s13, 1
    %p45 = por %p43, %p44
    %p46 = scmp.ne.s32.totalorder %s35, %s36
    %p47 = scmp.eq.s32.totalorder %s13, 0
    %p48 = por %p46, %p47
    %p49 = scmp.ne.s32.totalorder %s35, %s36
    %p50 = scmp.eq.s32.totalorder %s14, 1
    %p51 = por %p49, %p50
    %p53 = scmp.ne.s32.totalorder %s36, %s52
    %p54 = scmp.eq.s32.totalorder %s14, 0
    %p55 = por %p53, %p54
    %s56 = ssub.s32 %s15, %s27
    %p57 = scmp.eq.s32.totalorder %s56, 0
    %s59 = sadd.s32 %s58, 1
    %s60 = scalar_select %p57, %s58, %s59
    %p63 = pneg %p57
    %p64 = scmp.eq.s32.totalorder %s8, 1
    %p65 = por %p63, %p64
    %p66 = scmp.ne.s32.totalorder %s58, %s61
    %p67 = scmp.eq.s32.totalorder %s8, 0
    %p68 = por %p66, %p67
    %p69 = scmp.ne.s32.totalorder %s58, %s61
    %p70 = scmp.eq.s32.totalorder %s13, 1
    %p71 = por %p69, %p70
    %p72 = scmp.ne.s32.totalorder %s61, %s62
    %p73 = scmp.eq.s32.totalorder %s13, 0
    %p74 = por %p72, %p73
    %p75 = scmp.ne.s32.totalorder %s61, %s62
    %p76 = scmp.eq.s32.totalorder %s14, 1
    %p77 = por %p75, %p76
    %p79 = scmp.ne.s32.totalorder %s62, %s78
    %p80 = scmp.eq.s32.totalorder %s14, 0
    %p81 = por %p79, %p80
    %s82 = ssub.s32 %s15, %s27
    %p83 = scmp.eq.s32.totalorder %s82, 0
    %s85 = sadd.s32 %s84, 1
    %s86 = scalar_select %p83, %s84, %s85
    %p89 = pneg %p83
    %p90 = scmp.eq.s32.totalorder %s8, 1
    %p91 = por %p89, %p90
    %p92 = scmp.ne.s32.totalorder %s84, %s87
    %p93 = scmp.eq.s32.totalorder %s8, 0
    %p94 = por %p92, %p93
    %p95 = scmp.ne.s32.totalorder %s84, %s87
    %p96 = scmp.eq.s32.totalorder %s13, 1
    %p97 = por %p95, %p96
    %p98 = scmp.ne.s32.totalorder %s87, %s88
    %p99 = scmp.eq.s32.totalorder %s13, 0
    %p100 = por %p98, %p99
    %p101 = scmp.ne.s32.totalorder %s87, %s88
    %p102 = scmp.eq.s32.totalorder %s14, 1
    %p103 = por %p101, %p102
    %p105 = scmp.ne.s32.totalorder %s88, %s104
    %p106 = scmp.eq.s32.totalorder %s14, 0
    %p107 = por %p105, %p106
    %p108 = scmp.le.s32.totalorder 1, %s8
    %p109 = scmp.lt.s32.totalorder %s8, 3
    %p110 = pnand %p108, %p109
    %p111 = pneg %p110
    // Predicated region
    $region9: #{tpu_custom_call.1} parent=5 // pred_check
      _
    $region10: #{tpu_custom_call.1} parent=5 // pred_check_branch
      %113 = sbr.rel (%p110) target = $region12
    $region11: #{tpu_custom_call.1} parent=5 // pred_region
      %s114 = ssub.s32 %s8, 1
    $region12: #{tpu_custom_call.1} parent=5 // pred_fallthru
      _
    %p115 = scmp.lt.s32.totalorder %s8, 2
    // Predicated region
    $region13: #{tpu_custom_call.1} parent=5 // pred_check
      %p116 = pneg %p115
    $region14: #{tpu_custom_call.1} parent=5 // pred_check_branch
      %118 = sbr.rel (%p116) target = $region16
    $region15: #{tpu_custom_call.1} parent=5 // pred_region
      // Predicated region
      $region17: #{tpu_custom_call.1} parent=15 // pred_check
        %p119 = pneg %p42
      $region18: #{tpu_custom_call.1} parent=15 // pred_check_branch
        %121 = sbr.rel (%p119) target = $region20
      $region19: #{tpu_custom_call.1} parent=15 // pred_region
        %s122 = smul.u32 2, %s16
        %p123 = scmp.lt.s32.totalorder %s15, 1
        %s124 = scalar_select %p123, %s15, 1
        %p125 = scmp.lt.s32.totalorder %s122, 1
        %s126 = scalar_select %p125, %s122, 1
        %s127 = smul.addr %s124, 2
        %s128 = sadd.s32 %s126, %s127
        %s129 = smul.addr %s128, 8
        %s130 = scalar_lea.vmem %s0, %s129
        %s131 = smul.u32 2, %s16
      $region20: #{tpu_custom_call.1} parent=15 // pred_fallthru
        _
      // Predicated region
      $region21: #{tpu_custom_call.1} parent=15 // pred_check
        %p132 = pneg %p68
      $region22: #{tpu_custom_call.1} parent=15 // pred_check_branch
        %134 = sbr.rel (%p132) target = $region24
      $region23: #{tpu_custom_call.1} parent=15 // pred_region
        %p135 = scmp.lt.s32.totalorder %s15, 1
        %s136 = scalar_select %p135, %s15, 1
        %s137 = smul.addr %s136, 2
        %s138 = smul.addr %s137, 8
        %s139 = scalar_lea.vmem %s1, %s138
      $region24: #{tpu_custom_call.1} parent=15 // pred_fallthru
        _
    $region16: #{tpu_custom_call.1} parent=5 // pred_fallthru
      _
    %p140 = scmp.le.s32.totalorder 1, %s8
    %p141 = scmp.lt.s32.totalorder %s8, 3
    %p142 = pnand %p140, %p141
    %p143 = pneg %p142
    // Predicated region
    $region25: #{tpu_custom_call.1} parent=5 // pred_check
      _
    $region26: #{tpu_custom_call.1} parent=5 // pred_check_branch
      %145 = sbr.rel (%p142) target = $region28
    $region27: #{tpu_custom_call.1} parent=5 // pred_region
      %s146 = ssub.s32 %s8, 1
      %s147 = smul.u32 2, %s18
      %p148 = scmp.lt.s32.totalorder %s17, 1
      %s149 = scalar_select %p148, %s17, 1
      %p150 = scmp.lt.s32.totalorder %s147, 1
      %s151 = scalar_select %p150, %s147, 1
      %s152 = smul.addr %s149, 2
      %s153 = sadd.s32 %s151, %s152
      %s154 = smul.addr %s153, 8
      %s155 = scalar_lea.vmem %s0, %s154
      %p156 = pneg %p48
      %p157 = pneg %p45
      %p158 = scmp.lt.s32.totalorder %s17, 1
      %s159 = scalar_select %p158, %s17, 1
      %s160 = smul.addr %s159, 2
      %s161 = smul.addr %s160, 8
      %s162 = scalar_lea.vmem %s1, %s161
      %p163 = pneg %p74
      %p164 = pneg %p71
      %p165 = pneg %p100
      %p166 = pneg %p97
      %p167 = scmp.lt.s32.totalorder %s17, 1
      %s168 = scalar_select %p167, %s17, 1
      %s169 = scalar_lea.vmem %s2, %s168
      %s170 = smul.u32 2, %s18
      %p171 = scmp.lt.s32.totalorder %s17, 1
      %s172 = scalar_select %p171, %s17, 1
      %p173 = scmp.lt.s32.totalorder %s170, 1
      %s174 = scalar_select %p173, %s170, 1
      %s175 = smul.addr %s172, 2
      %s176 = sadd.s32 %s174, %s175
      %s177 = smul.addr %s176, 8
      %s178 = scalar_lea.vmem %s0, %s177
      %s179 = smul.u32 2, %s18
      %p180 = scmp.lt.s32.totalorder %s17, 1
      %s181 = scalar_select %p180, %s17, 1
      %s182 = smul.addr %s181, 2
      %s183 = smul.addr %s182, 8
      %s184 = scalar_lea.vmem %s1, %s183
      %p185 = scmp.lt.s32.totalorder %s17, 1
      %s186 = scalar_select %p185, %s17, 1
      %s187 = scalar_lea.vmem %s2, %s186
      %p188 = scmp.eq.s32.totalorder %s18, 0
      // Predicated region
      $region29: #{tpu_custom_call.1} parent=27 // pred_check
        %p189 = pneg %p188
      $region30: #{tpu_custom_call.1} parent=27 // pred_check_branch
        %191 = sbr.rel (%p189) target = $region32
      $region31: #{tpu_custom_call.1} parent=27 // pred_region
        %vm192 = vcmask 0
        %193 = vst.msk [vmem:[#allocation4] sm:$0x1] %vm192, 0.0
        %v194 = vld [vmem:[%s184] sm:$0xff]
        %v195 = vld [vmem:[%s184 + $0x8] sm:$0xff]
        %v196 = vand.u32 2147483647, %v194
        %v197 = vand.u32 2147483647, %v195
        %vm198 = vcmask 64512
        %v200 = vsel %vm198, 1.0, 0
        %v203 = vsel %vm198, %v196, 0
        %v206 = vsel %vm198, %v197, 0
        %208 = vmatprep.subr.mxu0 0.0
        %209 = vmatpush1.xpose.msra.mxu0 %v203
        %210 = vmatprep.subr.mxu0 0.0
        %211 = vmatpush1.xpose.msra.mxu0 %v206
        %212 = vmatprep.subr.mxu0 0.0
        %213 = vmatpush1.xpose.msra.mxu0 0.0
        %214 = vmatprep.subr.mxu0 0.0
        %215 = vmatpush1.xpose.msra.mxu0 0.0
        %216 = vmatprep.subr.mxu0 0.0
        %217 = vmatpush1.xpose.msra.mxu0 0.0
        %218 = vmatprep.subr.mxu0 0.0
        %219 = vmatpush1.xpose.msra.mxu0 0.0
        %220 = vmatprep.subr.mxu0 0.0
        %221 = vmatpush1.xpose.msra.mxu0 0.0
        %222 = vmatprep.subr.mxu0 0.0
        %223 = vmatpush1.xpose.msra.mxu0 0.0
        %224 = vmatprep.subr.mxu0 0.0
        %225 = vmatpush1.xpose.msra.mxu0 0.0
        %226 = vmatprep.subr.mxu0 0.0
        %227 = vmatpush1.xpose.msra.mxu0 0.0
        %228 = vmatprep.subr.mxu0 0.0
        %229 = vmatpush1.xpose.msra.mxu0 0.0
        %230 = vmatprep.subr.mxu0 0.0
        %231 = vmatpush1.xpose.msra.mxu0 0.0
        %232 = vmatprep.subr.mxu0 0.0
        %233 = vmatpush1.xpose.msra.mxu0 0.0
        %234 = vmatprep.subr.mxu0 0.0
        %235 = vmatpush1.xpose.msra.mxu0 0.0
        %236 = vmatprep.subr.mxu0 0.0
        %237 = vmatpush1.xpose.msra.mxu0 0.0
        %238 = vmatprep.subr.mxu0 0.0
        %239 = vmatpush1.xpose.msra.mxu0 0.0
        %240 = vmatprep.subr.mxu0 0.0
        %241 = vmatpush1.xpose.msra.mxu0 0.0
        %242 = vmatprep.subr.mxu0 0.0
        %243 = vmatpush1.xpose.msra.mxu0 0.0
        %244 = vmatprep.subr.mxu0 0.0
        %245 = vmatpush1.xpose.msra.mxu0 0.0
        %246 = vmatprep.subr.mxu0 0.0
        %247 = vmatpush1.xpose.msra.mxu0 0.0
        %248 = vmatprep.subr.mxu0 0.0
        %249 = vmatpush1.xpose.msra.mxu0 0.0
        %250 = vmatprep.subr.mxu0 0.0
        %251 = vmatpush1.xpose.msra.mxu0 0.0
        %252 = vmatprep.subr.mxu0 0.0
        %253 = vmatpush1.xpose.msra.mxu0 0.0
        %254 = vmatprep.subr.mxu0 0.0
        %255 = vmatpush1.xpose.msra.mxu0 0.0
        %256 = vmatprep.subr.mxu0 0.0
        %257 = vmatpush1.xpose.msra.mxu0 0.0
        %258 = vmatprep.subr.mxu0 0.0
        %259 = vmatpush1.xpose.msra.mxu0 0.0
        %260 = vmatprep.subr.mxu0 0.0
        %261 = vmatpush1.xpose.msra.mxu0 0.0
        %262 = vmatprep.subr.mxu0 0.0
        %263 = vmatpush1.xpose.msra.mxu0 0.0
        %264 = vmatprep.subr.mxu0 0.0
        %265 = vmatpush1.xpose.msra.mxu0 0.0
        %266 = vmatprep.subr.mxu0 0.0
        %267 = vmatpush1.xpose.msra.mxu0 0.0
        %268 = vmatprep.subr.mxu0 0.0
        %269 = vmatpush1.xpose.msra.mxu0 0.0
        %270 = vmatprep.subr.mxu0 0.0
        %271 = vmatpush1.xpose.msra.mxu0 0.0
        %272 = vmatprep.mubr.f32.mxu0 0.0
        %273 = vmatmul.mubr.f32.gmra.mrb[0].mxu0 %v200
        %v274 = vpop.f32.mrb[0].mxu0
        %v275 = vadd.f32 0.0, %v274
        %v276 = vpop.f32.mrb[0].mxu0
        %277 = vdwg.mxu0
        %v278 = vmax.f32 %v275, 1e-12
        %v279 = vrcp.pop %v278
        %vm280 = vcmask 122880
        %281 = vst.msk [vmem:[#allocation2] sm:$0x1] %vm280, %v279
      $region32: #{tpu_custom_call.1} parent=27 // pred_fallthru
        _
      %v282 = vld [vmem:[%s178] sm:$0xff]
      %v283 = vld [vmem:[%s178 + $0x8] sm:$0xff]
      %v284 = vand.u32 2147483647, %v282
      %v285 = vand.u32 2147483647, %v283
      %vm286 = vcmask 64512
      %v287 = vsel %vm286, %v284, 0.0
      %288 = vadd.xlane.f32.xlu0 %v287
      %v289 = vpop.xlane.xlu0 %288
      %v290 = vsel %vm286, %v285, 0.0
      %291 = vadd.xlane.f32.xlu0 %v290
      %v292 = vpop.xlane.xlu0 %291
      %v293 = vmax.f32 %v289, 1e-12
      %v294 = vmax.f32 %v292, 1e-12
      %v295 = vrcp.pop %v293
      %v296 = vrcp.pop %v294
      %v297 = vmul.f32 %v295, 14.285714
      %v298 = vmul.f32 %v296, 14.285714
      %v299 = vmul.f32 %v282, %v297
      %v300 = vmul.f32 %v283, %v298
      %s301 = smul.u32 %s18, 16
      %s302 = scalar_lea.vmem %s184, %s301
      %v303 = vld [vmem:[%s302] sm:$0xff]
      %v304 = vld [vmem:[%s302 + $0x8] sm:$0xff]
      %v305 = vand.u32 2147483647, %v303
      %v306 = vand.u32 2147483647, %v304
      %v307 = vsel %vm286, %v305, 0.0
      %308 = vadd.xlane.f32.xlu0 %v307
      %v309 = vpop.xlane.xlu0 %308
      %v310 = vsel %vm286, %v306, 0.0
      %311 = vadd.xlane.f32.xlu0 %v310
      %v312 = vpop.xlane.xlu0 %311
      %v313 = vmax.f32 %v309, 1e-12
      %v314 = vmax.f32 %v312, 1e-12
      %v315 = vrcp.pop %v313
      %v316 = vrcp.pop %v314
      %v317 = vmul.f32 %v299, %v303
      %v318 = vmul.f32 %v300, %v304
      %v319 = vsel %vm286, %v317, 0.0
      %320 = vadd.xlane.f32.xlu0 %v319
      %v321 = vpop.xlane.xlu0 %320
      %v322 = vsel %vm286, %v318, 0.0
      %323 = vadd.xlane.f32.xlu0 %v322
      %v324 = vpop.xlane.xlu0 %323
      %v325 = vmul.f32 %v321, %v315
      %v326 = vmul.f32 %v324, %v316
      %v327 = vld [vmem:[%s184] sm:$0xff]
      %v328 = vld [vmem:[%s184 + $0x8] sm:$0xff]
      %v330 = vsel %vm286, %v299, 0
      %v333 = vsel %vm286, %v300, 0
      %v336 = vsel %vm286, %v327, 0
      %v339 = vsel %vm286, %v328, 0
      %341 = vmatprep.subr.mxu0 0.0
      %342 = vmatpush1.xpose.msra.mxu0 %v336
      %343 = vmatprep.subr.mxu0 0.0
      %344 = vmatpush1.xpose.msra.mxu0 %v339
      %345 = vmatprep.subr.mxu0 0.0
      %346 = vmatpush1.xpose.msra.mxu0 0.0
      %347 = vmatprep.subr.mxu0 0.0
      %348 = vmatpush1.xpose.msra.mxu0 0.0
      %349 = vmatprep.subr.mxu0 0.0
      %350 = vmatpush1.xpose.msra.mxu0 0.0
      %351 = vmatprep.subr.mxu0 0.0
      %352 = vmatpush1.xpose.msra.mxu0 0.0
      %353 = vmatprep.subr.mxu0 0.0
      %354 = vmatpush1.xpose.msra.mxu0 0.0
      %355 = vmatprep.subr.mxu0 0.0
      %356 = vmatpush1.xpose.msra.mxu0 0.0
      %357 = vmatprep.subr.mxu0 0.0
      %358 = vmatpush1.xpose.msra.mxu0 0.0
      %359 = vmatprep.subr.mxu0 0.0
      %360 = vmatpush1.xpose.msra.mxu0 0.0
      %361 = vmatprep.subr.mxu0 0.0
      %362 = vmatpush1.xpose.msra.mxu0 0.0
      %363 = vmatprep.subr.mxu0 0.0
      %364 = vmatpush1.xpose.msra.mxu0 0.0
      %365 = vmatprep.subr.mxu0 0.0
      %366 = vmatpush1.xpose.msra.mxu0 0.0
      %367 = vmatprep.subr.mxu0 0.0
      %368 = vmatpush1.xpose.msra.mxu0 0.0
      %369 = vmatprep.subr.mxu0 0.0
      %370 = vmatpush1.xpose.msra.mxu0 0.0
      %371 = vmatprep.subr.mxu0 0.0
      %372 = vmatpush1.xpose.msra.mxu0 0.0
      %373 = vmatprep.subr.mxu0 0.0
      %374 = vmatpush1.xpose.msra.mxu0 0.0
      %375 = vmatprep.subr.mxu0 0.0
      %376 = vmatpush1.xpose.msra.mxu0 0.0
      %377 = vmatprep.subr.mxu0 0.0
      %378 = vmatpush1.xpose.msra.mxu0 0.0
      %379 = vmatprep.subr.mxu0 0.0
      %380 = vmatpush1.xpose.msra.mxu0 0.0
      %381 = vmatprep.subr.mxu0 0.0
      %382 = vmatpush1.xpose.msra.mxu0 0.0
      %383 = vmatprep.subr.mxu0 0.0
      %384 = vmatpush1.xpose.msra.mxu0 0.0
      %385 = vmatprep.subr.mxu0 0.0
      %386 = vmatpush1.xpose.msra.mxu0 0.0
      %387 = vmatprep.subr.mxu0 0.0
      %388 = vmatpush1.xpose.msra.mxu0 0.0
      %389 = vmatprep.subr.mxu0 0.0
      %390 = vmatpush1.xpose.msra.mxu0 0.0
      %391 = vmatprep.subr.mxu0 0.0
      %392 = vmatpush1.xpose.msra.mxu0 0.0
      %393 = vmatprep.subr.mxu0 0.0
      %394 = vmatpush1.xpose.msra.mxu0 0.0
      %395 = vmatprep.subr.mxu0 0.0
      %396 = vmatpush1.xpose.msra.mxu0 0.0
      %397 = vmatprep.subr.mxu0 0.0
      %398 = vmatpush1.xpose.msra.mxu0 0.0
      %399 = vmatprep.subr.mxu0 0.0
      %400 = vmatpush1.xpose.msra.mxu0 0.0
      %401 = vmatprep.subr.mxu0 0.0
      %402 = vmatpush1.xpose.msra.mxu0 0.0
      %403 = vmatprep.subr.mxu0 0.0
      %404 = vmatpush1.xpose.msra.mxu0 0.0
      %405 = vmatprep.mubr.f32.mxu0 0.0
      %406 = vmatmul.mubr.f32.gmra.mrb[0].mxu0 %v330
      %v407 = vpop.f32.mrb[0].mxu0
      %v408 = vadd.f32 0.0, %v407
      %v409 = vpop.f32.mrb[0].mxu0
      %410 = vmatprep.mubr.f32.mxu0 0.0
      %411 = vmatmul.mubr.f32.gmra.mrb[0].mxu0 %v333
      %v412 = vpop.f32.mrb[0].mxu0
      %v413 = vadd.f32 0.0, %v412
      %v414 = vpop.f32.mrb[0].mxu0
      %415 = vdwg.mxu0
      %v416 = vld [vmem:[#allocation2] sm:$0x1]
      %v418 = vlaneseq
      %v419 = vshrl.u32 %v418, 7
      %v420 = vsub.s32 0, %v419
      %v421 = vrot.slane %v416, %v420
      %v423 = vmul.f32 %v408, %v421
      %v424 = vmul.f32 %v413, %v421
      %vm425 = vcmask 130048
      %v426 = vsel %vm425, %v423, -inf
      %427 = vmax.xlane.f32.xlu0 %v426
      %v428 = vpop.xlane.xlu0 %427
      %v429 = vsel %vm425, %v424, -inf
      %430 = vmax.xlane.f32.xlu0 %v429
      %v431 = vpop.xlane.xlu0 %430
      %v432 = vsub.f32 %v423, %v428
      %v433 = vsub.f32 %v424, %v431
      %v434 = vmul.f32 %v432, 1.442695
      %v435 = vpow.pop %v434
      %v436 = vmul.f32 %v433, 1.442695
      %v437 = vpow.pop %v436
      %v438 = vsel %vm425, %v435, 0.0
      %439 = vadd.xlane.f32.xlu0 %v438
      %v440 = vpop.xlane.xlu0 %439
      %v441 = vsel %vm425, %v437, 0.0
      %442 = vadd.xlane.f32.xlu0 %v441
      %v443 = vpop.xlane.xlu0 %442
      %v444 = vlog2.pop %v440
      %v445 = vmul.f32 %v444, 0.6931472
      %v446 = vlog2.pop %v443
      %v447 = vmul.f32 %v446, 0.6931472
      %v448 = vadd.f32 %v428, %v445
      %v449 = vadd.f32 %v431, %v447
      %v450 = vsub.f32 %v448, %v325
      %v451 = vsub.f32 %v449, %v326
      %v452 = vld [vmem:[#allocation4] sm:$0x1]
      %vm453 = vcmask 7168
      %v454 = vsel %vm453, %v450, 0.0
      %v455 = vsel %vm453, %v451, 0.0
      %v456 = vadd.f32 %v454, %v455
      %457 = vadd.xlane.f32.xlu0 %v456
      %v458 = vpop.xlane.xlu0 %457
      %v459 = vrot.slane %v458, 4
      %v460 = vadd.f32 %v458, %v459
      %v461 = vrot.slane %v460, 2
      %v462 = vadd.f32 %v460, %v461
      %v463 = vrot.slane %v462, 1
      %v464 = vadd.f32 %v462, %v463
      %s465 = vtos %v464
      %v466 = vstv %s465
      %v467 = vadd.f32 %v452, %v466
      %vm468 = vcmask 0
      %469 = vst.msk [vmem:[#allocation4] sm:$0x1] %vm468, %v467
      // Predicated region
      $region33: #{tpu_custom_call.1} parent=27 // pred_check
        %p470 = pneg %p188
      $region34: #{tpu_custom_call.1} parent=27 // pred_check_branch
        %472 = sbr.rel (%p470) target = $region36
      $region35: #{tpu_custom_call.1} parent=27 // pred_region
        %v473 = vld [vmem:[#allocation4] sm:$0x1]
        %474 = vst.msk [vmem:[%s187] sm:$0x1] %vm468, %v473
      $region36: #{tpu_custom_call.1} parent=27 // pred_fallthru
        _
      %p475 = scmp.lt.s32.totalorder %s17, 1
      %s476 = scalar_select %p475, %s17, 1
      %s477 = scalar_lea.vmem %s2, %s476
      // Predicated region
      $region37: #{tpu_custom_call.1} parent=27 // pred_check
        %p478 = pneg %p97
      $region38: #{tpu_custom_call.1} parent=27 // pred_check_branch
        %480 = sbr.rel (%p478) target = $region40
      $region39: #{tpu_custom_call.1} parent=27 // pred_region
        _
      $region40: #{tpu_custom_call.1} parent=27 // pred_fallthru
        _
    $region28: #{tpu_custom_call.1} parent=5 // pred_fallthru
      _
    %p481 = scmp.le.s32.totalorder 2, %s8
    // Predicated region
    $region41: #{tpu_custom_call.1} parent=5 // pred_check
      %p482 = pneg %p481
    $region42: #{tpu_custom_call.1} parent=5 // pred_check_branch
      %484 = sbr.rel (%p482) target = $region44
    $region43: #{tpu_custom_call.1} parent=5 // pred_region
      %s485 = ssub.s32 %s8, 2
      // Predicated region
      $region45: #{tpu_custom_call.1} parent=43 // pred_check
        %p486 = pneg %p103
      $region46: #{tpu_custom_call.1} parent=43 // pred_check_branch
        %488 = sbr.rel (%p486) target = $region48
      $region47: #{tpu_custom_call.1} parent=43 // pred_region
        %p489 = scmp.lt.s32.totalorder %s19, 1
        %s490 = scalar_select %p489, %s19, 1
        %s491 = scalar_lea.vmem %s2, %s490
      $region48: #{tpu_custom_call.1} parent=43 // pred_fallthru
        _
    $region44: #{tpu_custom_call.1} parent=5 // pred_fallthru
      _
  $region6: #{tpu_custom_call.1} parent=0 // loop_footer
    %s12 = sadd.s32 1, %s8
  $region7: #{tpu_custom_call.1} parent=0 // loop_footer_branch
    %7 = sbr.rel target = $region3
  $region8: #{tpu_custom_call.1} parent=0 // loop_exit
    _

</llo_original>
